<compile_context>
chip_gen: v7x
topology: tpu7x:2x2x1
jax: 0.10.0
libtpu: 0.0.40
codegen_flags: <defaults>
</compile_context>

<pallas_src>
import functools

import jax
import jax.numpy as jnp
import numpy as np
from jax.experimental import pallas as pl
from jax.experimental.pallas import tpu as pltpu

LANES = 128                   # vreg lane width
SUBLANES = 8                  # vreg sublane depth (f32)
TILE = SUBLANES * LANES       # elements per (8, 128) vreg tile
PAD_VALUE = -1e30             # padding for w: exp() underflows to 0, never wins max()
SMEM_W_BYTES_MAX = 256 * 1024 # scalar-gather path only when 4*N^3 fits comfortably in SMEM


def _round_up(x, m):
    return (x + m - 1) // m * m


def noncausal_kernel(idx_ref, w_smem_ref, w_vmem_ref, out_ref, *, n, m_real, b_real):
    """
    idx_ref    : (3*B,) int32 in SMEM       -- flat row-major (B,3) index triples
    w_smem_ref : (N^3,) f32 in SMEM         -- flat weights, scalar gather source
    w_vmem_ref : (n_tiles, 8, 128) f32 VMEM -- same weights, lane-dense, for the LSE
    out_ref    : (1, B_pad) f32 VMEM        -- lane-dense output, B_pad % 128 == 0
    """
    # Stable logsumexp over the whole (logical) weight tensor, done with vector ops.
    w = w_vmem_ref[...]                                       # (n_tiles, 8, 128)
    m = jnp.max(w, keepdims=True)                             # (1, 1, 1)
    s = jnp.sum(jnp.exp(w - m), keepdims=True)                # (1, 1, 1)
    lse = (m + jnp.log(s))[0]                                 # (1, 1)

    b_pad = out_ref.shape[1]
    # Hoisted once (JAX does not CSE broadcast_in_dim inside the loop).
    out_iota = jax.lax.broadcasted_iota(jnp.int32, (1, b_pad), 1)

    def body(b, acc):
        base = 3 * b
        i0 = idx_ref[base]
        i1 = idx_ref[base + 1]
        i2 = idx_ref[base + 2]
        flat = (i0 * n + i1) * n + i2
        # Clamp so a bad index can never read outside w's SMEM allocation
        # (no runtime bounds check on refs). Diverges from torch's indexing
        # error on OOB indices, but is safe.
        flat = jnp.clip(flat, 0, m_real - 1)
        picked = w_smem_ref[flat]                             # single scalar SMEM load
        # Deposit the scalar into output lane b (one select per sample, stays in vregs).
        return jnp.where(out_iota == b, picked, acc)

    acc0 = jnp.zeros((1, b_pad), dtype=jnp.float32)
    # Bounded unroll: full LLO visibility for small batches, no spill blowup for big ones.
    acc = jax.lax.fori_loop(0, b_real, body, acc0, unroll=8)

    out_ref[...] = acc - lse                                  # single full-lane unmasked store


def noncausal_forward(w, inputs):
    """w: (N, N, N) float32; inputs: (B, 3) int -> (B,) float32."""
    n = w.shape[0]
    m_real = n * n * n
    assert m_real < 2**31, "flat index would overflow int32"
    b = int(inputs.shape[0])

    if b == 0:
        return jnp.zeros((0,), dtype=jnp.float32)

    if 4 * m_real > SMEM_W_BYTES_MAX:
        # TODO(synk): implement the streaming-LSE / VMEM-gather path for large N.
        raise NotImplementedError("N too large for the SMEM scalar-gather path")

    m_pad = _round_up(m_real, TILE)
    b_pad = _round_up(b, LANES)

    w_flat = w.reshape(-1).astype(jnp.float32)                # (N^3,), SMEM gather source
    if m_pad != m_real:
        # Only pad when N^3 is not vreg-aligned (avoids an extra copy of w otherwise).
        w_vmem = jnp.concatenate(
            [w_flat, jnp.full((m_pad - m_real,), PAD_VALUE, dtype=jnp.float32)])
    else:
        w_vmem = w_flat
    w_vmem = w_vmem.reshape(m_pad // TILE, SUBLANES, LANES)   # lane-dense slab for the LSE

    idx_flat = inputs.astype(jnp.int32).reshape(-1)           # (3*B,) 1-D SMEM layout

    kernel = functools.partial(noncausal_kernel, n=n, m_real=m_real, b_real=b)
    out = pl.pallas_call(
        kernel,
        out_shape=jax.ShapeDtypeStruct((1, b_pad), jnp.float32),
        in_specs=[
            pl.BlockSpec(memory_space=pltpu.SMEM),            # indices (scalars)
            pl.BlockSpec(memory_space=pltpu.SMEM),            # flat w (scalar gather)
            pl.BlockSpec(memory_space=pltpu.VMEM),            # lane-dense w (vector LSE)
        ],
        out_specs=pl.BlockSpec(memory_space=pltpu.VMEM),
    )(idx_flat, w_flat, w_vmem)
    return out[0, :b]


if __name__ == "__main__":
    key = jax.random.PRNGKey(0)
    k_w, k_idx = jax.random.split(key)

    N = 16          # vocabulary size per variable (w is N x N x N)
    B = 8           # batch of (A, B, C) index triples, shaped (B, 3) like the torch module

    # Module __init__ uses zeros; use deterministic random w so the gather +
    # logsumexp path is actually exercised.
    w = jax.random.normal(k_w, (N, N, N), dtype=jnp.float32)
    inputs = jax.random.randint(k_idx, (B, 3), 0, N, dtype=jnp.int32)

    out = noncausal_forward(w, inputs)
    out = jax.block_until_ready(out)

    # pure-JAX reference check
    cste = jax.scipy.special.logsumexp(w)
    ref = w[inputs[:, 0], inputs[:, 1], inputs[:, 2]] - cste
    np.testing.assert_allclose(np.asarray(out), np.asarray(ref), rtol=1e-5, atol=1e-5)

    print("KERNEL_OK")
</pallas_src>

<mosaic_0001>
module attributes {stable_mosaic.version = 11 : i64} {
  func.func @noncausal_kernel(%arg0: memref<24xi32, #tpu.memory_space<smem>>, %arg1: memref<4096xf32, #tpu.memory_space<smem>>, %arg2: memref<4x8x128xf32, #tpu.memory_space<vmem>>, %arg3: memref<1x128xf32, #tpu.memory_space<vmem>>) attributes {dimension_semantics = [], scalar_prefetch = 0 : i64, scratch_operands = 0 : i64, tpu.core_type = #tpu.core_type<tc>} {
    %c0 = arith.constant 0 : index
    %c0_0 = arith.constant 0 : index
    %c0_1 = arith.constant 0 : index
    %0 = vector.load %arg2[%c0, %c0_0, %c0_1] : memref<4x8x128xf32, #tpu.memory_space<vmem>>, vector<4x8x128xf32>
    %1 = vector.shape_cast %0 : vector<4x8x128xf32> to vector<1x4x8x128xf32>
    %cst = arith.constant dense<0xFF800000> : vector<1xf32>
    %2 = vector.multi_reduction <maximumf>, %1, %cst [1, 2, 3] : vector<1x4x8x128xf32> to vector<1xf32>
    %3 = vector.shape_cast %2 : vector<1xf32> to vector<1x1x1x1xf32>
    %4 = vector.extract %3[0, 0, 0, 0] : f32 from vector<1x1x1x1xf32>
    %5 = vector.broadcast %4 : f32 to vector<1x1x1xf32>
    %6 = vector.broadcast %5 : vector<1x1x1xf32> to vector<4x8x128xf32>
    %7 = arith.subf %0, %6 : vector<4x8x128xf32>
    %8 = math.exp %7 : vector<4x8x128xf32>
    %9 = vector.shape_cast %8 : vector<4x8x128xf32> to vector<1x4x8x128xf32>
    %cst_2 = arith.constant dense<0.000000e+00> : vector<1xf32>
    %10 = vector.multi_reduction <add>, %9, %cst_2 [1, 2, 3] : vector<1x4x8x128xf32> to vector<1xf32>
    %11 = vector.shape_cast %10 : vector<1xf32> to vector<1x1x1x1xf32>
    %12 = vector.extract %11[0, 0, 0, 0] : f32 from vector<1x1x1x1xf32>
    %13 = vector.broadcast %12 : f32 to vector<1x1x1xf32>
    %14 = math.log %13 : vector<1x1x1xf32>
    %15 = arith.addf %5, %14 : vector<1x1x1xf32>
    %16 = vector.shape_cast %15 : vector<1x1x1xf32> to vector<1x1xf32>
    %17 = tpu.iota {dimensions = array<i32: 1>} : vector<1x128xi32>
    %cst_3 = arith.constant 0.000000e+00 : f32
    %18 = vector.broadcast %cst_3 : f32 to vector<1x128xf32>
    %c0_i32 = arith.constant 0 : i32
    %c3_i32 = arith.constant 3 : i32
    %19 = arith.muli %c3_i32, %c0_i32 : i32
    %20 = arith.index_cast %19 : i32 to index
    %21 = memref.load %arg0[%20] : memref<24xi32, #tpu.memory_space<smem>>
    %c1_i32 = arith.constant 1 : i32
    %22 = arith.addi %19, %c1_i32 : i32
    %23 = arith.index_cast %22 : i32 to index
    %24 = memref.load %arg0[%23] : memref<24xi32, #tpu.memory_space<smem>>
    %c2_i32 = arith.constant 2 : i32
    %25 = arith.addi %19, %c2_i32 : i32
    %26 = arith.index_cast %25 : i32 to index
    %27 = memref.load %arg0[%26] : memref<24xi32, #tpu.memory_space<smem>>
    %c16_i32 = arith.constant 16 : i32
    %28 = arith.muli %21, %c16_i32 : i32
    %29 = arith.addi %28, %24 : i32
    %c16_i32_4 = arith.constant 16 : i32
    %30 = arith.muli %29, %c16_i32_4 : i32
    %31 = arith.addi %30, %27 : i32
    %c0_i32_5 = arith.constant 0 : i32
    %c4095_i32 = arith.constant 4095 : i32
    %32 = arith.maxsi %c0_i32_5, %31 : i32
    %33 = arith.minsi %c4095_i32, %32 : i32
    %34 = arith.index_cast %33 : i32 to index
    %35 = memref.load %arg1[%34] : memref<4096xf32, #tpu.memory_space<smem>>
    %36 = vector.broadcast %c0_i32 : i32 to vector<1x128xi32>
    %37 = arith.cmpi eq, %17, %36 : vector<1x128xi32>
    %38 = vector.broadcast %35 : f32 to vector<1x128xf32>
    %39 = arith.select %37, %38, %18 : vector<1x128xi1>, vector<1x128xf32>
    %c1_i32_6 = arith.constant 1 : i32
    %c3_i32_7 = arith.constant 3 : i32
    %40 = arith.muli %c3_i32_7, %c1_i32_6 : i32
    %41 = arith.index_cast %40 : i32 to index
    %42 = memref.load %arg0[%41] : memref<24xi32, #tpu.memory_space<smem>>
    %c1_i32_8 = arith.constant 1 : i32
    %43 = arith.addi %40, %c1_i32_8 : i32
    %44 = arith.index_cast %43 : i32 to index
    %45 = memref.load %arg0[%44] : memref<24xi32, #tpu.memory_space<smem>>
    %c2_i32_9 = arith.constant 2 : i32
    %46 = arith.addi %40, %c2_i32_9 : i32
    %47 = arith.index_cast %46 : i32 to index
    %48 = memref.load %arg0[%47] : memref<24xi32, #tpu.memory_space<smem>>
    %c16_i32_10 = arith.constant 16 : i32
    %49 = arith.muli %42, %c16_i32_10 : i32
    %50 = arith.addi %49, %45 : i32
    %c16_i32_11 = arith.constant 16 : i32
    %51 = arith.muli %50, %c16_i32_11 : i32
    %52 = arith.addi %51, %48 : i32
    %c0_i32_12 = arith.constant 0 : i32
    %c4095_i32_13 = arith.constant 4095 : i32
    %53 = arith.maxsi %c0_i32_12, %52 : i32
    %54 = arith.minsi %c4095_i32_13, %53 : i32
    %55 = arith.index_cast %54 : i32 to index
    %56 = memref.load %arg1[%55] : memref<4096xf32, #tpu.memory_space<smem>>
    %57 = vector.broadcast %c1_i32_6 : i32 to vector<1x128xi32>
    %58 = arith.cmpi eq, %17, %57 : vector<1x128xi32>
    %59 = vector.broadcast %56 : f32 to vector<1x128xf32>
    %60 = arith.select %58, %59, %39 : vector<1x128xi1>, vector<1x128xf32>
    %c2_i32_14 = arith.constant 2 : i32
    %c3_i32_15 = arith.constant 3 : i32
    %61 = arith.muli %c3_i32_15, %c2_i32_14 : i32
    %62 = arith.index_cast %61 : i32 to index
    %63 = memref.load %arg0[%62] : memref<24xi32, #tpu.memory_space<smem>>
    %c1_i32_16 = arith.constant 1 : i32
    %64 = arith.addi %61, %c1_i32_16 : i32
    %65 = arith.index_cast %64 : i32 to index
    %66 = memref.load %arg0[%65] : memref<24xi32, #tpu.memory_space<smem>>
    %c2_i32_17 = arith.constant 2 : i32
    %67 = arith.addi %61, %c2_i32_17 : i32
    %68 = arith.index_cast %67 : i32 to index
    %69 = memref.load %arg0[%68] : memref<24xi32, #tpu.memory_space<smem>>
    %c16_i32_18 = arith.constant 16 : i32
    %70 = arith.muli %63, %c16_i32_18 : i32
    %71 = arith.addi %70, %66 : i32
    %c16_i32_19 = arith.constant 16 : i32
    %72 = arith.muli %71, %c16_i32_19 : i32
    %73 = arith.addi %72, %69 : i32
    %c0_i32_20 = arith.constant 0 : i32
    %c4095_i32_21 = arith.constant 4095 : i32
    %74 = arith.maxsi %c0_i32_20, %73 : i32
    %75 = arith.minsi %c4095_i32_21, %74 : i32
    %76 = arith.index_cast %75 : i32 to index
    %77 = memref.load %arg1[%76] : memref<4096xf32, #tpu.memory_space<smem>>
    %78 = vector.broadcast %c2_i32_14 : i32 to vector<1x128xi32>
    %79 = arith.cmpi eq, %17, %78 : vector<1x128xi32>
    %80 = vector.broadcast %77 : f32 to vector<1x128xf32>
    %81 = arith.select %79, %80, %60 : vector<1x128xi1>, vector<1x128xf32>
    %c3_i32_22 = arith.constant 3 : i32
    %c3_i32_23 = arith.constant 3 : i32
    %82 = arith.muli %c3_i32_23, %c3_i32_22 : i32
    %83 = arith.index_cast %82 : i32 to index
    %84 = memref.load %arg0[%83] : memref<24xi32, #tpu.memory_space<smem>>
    %c1_i32_24 = arith.constant 1 : i32
    %85 = arith.addi %82, %c1_i32_24 : i32
    %86 = arith.index_cast %85 : i32 to index
    %87 = memref.load %arg0[%86] : memref<24xi32, #tpu.memory_space<smem>>
    %c2_i32_25 = arith.constant 2 : i32
    %88 = arith.addi %82, %c2_i32_25 : i32
    %89 = arith.index_cast %88 : i32 to index
    %90 = memref.load %arg0[%89] : memref<24xi32, #tpu.memory_space<smem>>
    %c16_i32_26 = arith.constant 16 : i32
    %91 = arith.muli %84, %c16_i32_26 : i32
    %92 = arith.addi %91, %87 : i32
    %c16_i32_27 = arith.constant 16 : i32
    %93 = arith.muli %92, %c16_i32_27 : i32
    %94 = arith.addi %93, %90 : i32
    %c0_i32_28 = arith.constant 0 : i32
    %c4095_i32_29 = arith.constant 4095 : i32
    %95 = arith.maxsi %c0_i32_28, %94 : i32
    %96 = arith.minsi %c4095_i32_29, %95 : i32
    %97 = arith.index_cast %96 : i32 to index
    %98 = memref.load %arg1[%97] : memref<4096xf32, #tpu.memory_space<smem>>
    %99 = vector.broadcast %c3_i32_22 : i32 to vector<1x128xi32>
    %100 = arith.cmpi eq, %17, %99 : vector<1x128xi32>
    %101 = vector.broadcast %98 : f32 to vector<1x128xf32>
    %102 = arith.select %100, %101, %81 : vector<1x128xi1>, vector<1x128xf32>
    %c4_i32 = arith.constant 4 : i32
    %c3_i32_30 = arith.constant 3 : i32
    %103 = arith.muli %c3_i32_30, %c4_i32 : i32
    %104 = arith.index_cast %103 : i32 to index
    %105 = memref.load %arg0[%104] : memref<24xi32, #tpu.memory_space<smem>>
    %c1_i32_31 = arith.constant 1 : i32
    %106 = arith.addi %103, %c1_i32_31 : i32
    %107 = arith.index_cast %106 : i32 to index
    %108 = memref.load %arg0[%107] : memref<24xi32, #tpu.memory_space<smem>>
    %c2_i32_32 = arith.constant 2 : i32
    %109 = arith.addi %103, %c2_i32_32 : i32
    %110 = arith.index_cast %109 : i32 to index
    %111 = memref.load %arg0[%110] : memref<24xi32, #tpu.memory_space<smem>>
    %c16_i32_33 = arith.constant 16 : i32
    %112 = arith.muli %105, %c16_i32_33 : i32
    %113 = arith.addi %112, %108 : i32
    %c16_i32_34 = arith.constant 16 : i32
    %114 = arith.muli %113, %c16_i32_34 : i32
    %115 = arith.addi %114, %111 : i32
    %c0_i32_35 = arith.constant 0 : i32
    %c4095_i32_36 = arith.constant 4095 : i32
    %116 = arith.maxsi %c0_i32_35, %115 : i32
    %117 = arith.minsi %c4095_i32_36, %116 : i32
    %118 = arith.index_cast %117 : i32 to index
    %119 = memref.load %arg1[%118] : memref<4096xf32, #tpu.memory_space<smem>>
    %120 = vector.broadcast %c4_i32 : i32 to vector<1x128xi32>
    %121 = arith.cmpi eq, %17, %120 : vector<1x128xi32>
    %122 = vector.broadcast %119 : f32 to vector<1x128xf32>
    %123 = arith.select %121, %122, %102 : vector<1x128xi1>, vector<1x128xf32>
    %c5_i32 = arith.constant 5 : i32
    %c3_i32_37 = arith.constant 3 : i32
    %124 = arith.muli %c3_i32_37, %c5_i32 : i32
    %125 = arith.index_cast %124 : i32 to index
    %126 = memref.load %arg0[%125] : memref<24xi32, #tpu.memory_space<smem>>
    %c1_i32_38 = arith.constant 1 : i32
    %127 = arith.addi %124, %c1_i32_38 : i32
    %128 = arith.index_cast %127 : i32 to index
    %129 = memref.load %arg0[%128] : memref<24xi32, #tpu.memory_space<smem>>
    %c2_i32_39 = arith.constant 2 : i32
    %130 = arith.addi %124, %c2_i32_39 : i32
    %131 = arith.index_cast %130 : i32 to index
    %132 = memref.load %arg0[%131] : memref<24xi32, #tpu.memory_space<smem>>
    %c16_i32_40 = arith.constant 16 : i32
    %133 = arith.muli %126, %c16_i32_40 : i32
    %134 = arith.addi %133, %129 : i32
    %c16_i32_41 = arith.constant 16 : i32
    %135 = arith.muli %134, %c16_i32_41 : i32
    %136 = arith.addi %135, %132 : i32
    %c0_i32_42 = arith.constant 0 : i32
    %c4095_i32_43 = arith.constant 4095 : i32
    %137 = arith.maxsi %c0_i32_42, %136 : i32
    %138 = arith.minsi %c4095_i32_43, %137 : i32
    %139 = arith.index_cast %138 : i32 to index
    %140 = memref.load %arg1[%139] : memref<4096xf32, #tpu.memory_space<smem>>
    %141 = vector.broadcast %c5_i32 : i32 to vector<1x128xi32>
    %142 = arith.cmpi eq, %17, %141 : vector<1x128xi32>
    %143 = vector.broadcast %140 : f32 to vector<1x128xf32>
    %144 = arith.select %142, %143, %123 : vector<1x128xi1>, vector<1x128xf32>
    %c6_i32 = arith.constant 6 : i32
    %c3_i32_44 = arith.constant 3 : i32
    %145 = arith.muli %c3_i32_44, %c6_i32 : i32
    %146 = arith.index_cast %145 : i32 to index
    %147 = memref.load %arg0[%146] : memref<24xi32, #tpu.memory_space<smem>>
    %c1_i32_45 = arith.constant 1 : i32
    %148 = arith.addi %145, %c1_i32_45 : i32
    %149 = arith.index_cast %148 : i32 to index
    %150 = memref.load %arg0[%149] : memref<24xi32, #tpu.memory_space<smem>>
    %c2_i32_46 = arith.constant 2 : i32
    %151 = arith.addi %145, %c2_i32_46 : i32
    %152 = arith.index_cast %151 : i32 to index
    %153 = memref.load %arg0[%152] : memref<24xi32, #tpu.memory_space<smem>>
    %c16_i32_47 = arith.constant 16 : i32
    %154 = arith.muli %147, %c16_i32_47 : i32
    %155 = arith.addi %154, %150 : i32
    %c16_i32_48 = arith.constant 16 : i32
    %156 = arith.muli %155, %c16_i32_48 : i32
    %157 = arith.addi %156, %153 : i32
    %c0_i32_49 = arith.constant 0 : i32
    %c4095_i32_50 = arith.constant 4095 : i32
    %158 = arith.maxsi %c0_i32_49, %157 : i32
    %159 = arith.minsi %c4095_i32_50, %158 : i32
    %160 = arith.index_cast %159 : i32 to index
    %161 = memref.load %arg1[%160] : memref<4096xf32, #tpu.memory_space<smem>>
    %162 = vector.broadcast %c6_i32 : i32 to vector<1x128xi32>
    %163 = arith.cmpi eq, %17, %162 : vector<1x128xi32>
    %164 = vector.broadcast %161 : f32 to vector<1x128xf32>
    %165 = arith.select %163, %164, %144 : vector<1x128xi1>, vector<1x128xf32>
    %c7_i32 = arith.constant 7 : i32
    %c3_i32_51 = arith.constant 3 : i32
    %166 = arith.muli %c3_i32_51, %c7_i32 : i32
    %167 = arith.index_cast %166 : i32 to index
    %168 = memref.load %arg0[%167] : memref<24xi32, #tpu.memory_space<smem>>
    %c1_i32_52 = arith.constant 1 : i32
    %169 = arith.addi %166, %c1_i32_52 : i32
    %170 = arith.index_cast %169 : i32 to index
    %171 = memref.load %arg0[%170] : memref<24xi32, #tpu.memory_space<smem>>
    %c2_i32_53 = arith.constant 2 : i32
    %172 = arith.addi %166, %c2_i32_53 : i32
    %173 = arith.index_cast %172 : i32 to index
    %174 = memref.load %arg0[%173] : memref<24xi32, #tpu.memory_space<smem>>
    %c16_i32_54 = arith.constant 16 : i32
    %175 = arith.muli %168, %c16_i32_54 : i32
    %176 = arith.addi %175, %171 : i32
    %c16_i32_55 = arith.constant 16 : i32
    %177 = arith.muli %176, %c16_i32_55 : i32
    %178 = arith.addi %177, %174 : i32
    %c0_i32_56 = arith.constant 0 : i32
    %c4095_i32_57 = arith.constant 4095 : i32
    %179 = arith.maxsi %c0_i32_56, %178 : i32
    %180 = arith.minsi %c4095_i32_57, %179 : i32
    %181 = arith.index_cast %180 : i32 to index
    %182 = memref.load %arg1[%181] : memref<4096xf32, #tpu.memory_space<smem>>
    %183 = vector.broadcast %c7_i32 : i32 to vector<1x128xi32>
    %184 = arith.cmpi eq, %17, %183 : vector<1x128xi32>
    %185 = vector.broadcast %182 : f32 to vector<1x128xf32>
    %186 = arith.select %184, %185, %165 : vector<1x128xi1>, vector<1x128xf32>
    %c8_i32 = arith.constant 8 : i32
    %187 = vector.broadcast %16 : vector<1x1xf32> to vector<1x128xf32>
    %188 = arith.subf %186, %187 : vector<1x128xf32>
    %c0_58 = arith.constant 0 : index
    %c0_59 = arith.constant 0 : index
    %189 = vector.load %arg3[%c0_58, %c0_59] : memref<1x128xf32, #tpu.memory_space<vmem>>, vector<1x128xf32>
    tpu.vector_store %arg3[%c0_58, %c0_59], %188 {strides = array<i32>} : memref<1x128xf32, #tpu.memory_space<vmem>>, vector<1x128xf32>,
    return
  }
}

</mosaic_0001>

<llo_original>
// kernel: tpu_custom_call.1
$region0: #{tpu_custom_call.1}
  #allocation0 [shape = 'u32[]', space=smem, size = 0x4, offset = 0x4, fixed_abs, tag = 'smem constant byte address 0x4 - core index']
  #allocation1 [shape = 'u32[144,128]{1,0:T(1,128)}', space=vmem, size = 0x12000, scoped, tag = 'internal scratch']
  %s0 = inlined_call_operand.hbm [shape: s32[24], index: 0, kind: input, shape index: {}]
  %s1 = inlined_call_operand.hbm [shape: f32[4096], index: 1, kind: input, shape index: {}]
  %s2 = inlined_call_operand.hbm [shape: f32[4,8,128], index: 2, kind: input, shape index: {}]
  %s3 = inlined_call_operand.hbm [shape: f32[1,128], index: 3, kind: output, shape index: {}]
  %s4 = sld [smem:[#allocation0]]
  $region34: #{tpu_custom_call.1} parent=0
    _
  %s6 = ssub.s32 1, %s4
  %s7 = scalar_select 0, %s6, %s4
  $region1: #{tpu_custom_call.1} parent=0
    #allocation2 [shape = 'u8[512]{0}', space=smem, size = 0x200, scoped, tag = 'input window, operand 0, single buffered']
    #allocation3 [shape = 's32[1]{0}', space=sflag, size = 0x4, scoped, tag = 'scoped memory for tpu_custom_call.1']
    #allocation4 [shape = 's32[1]{0}', space=sflag, size = 0x4, scoped, tag = 'scoped memory for tpu_custom_call.1']
    #allocation5 [shape = 's32[1]{0}', space=sflag, size = 0x4, scoped, tag = 'scoped memory for tpu_custom_call.1']
    #allocation6 [shape = 'u8[16384]{0}', space=smem, size = 0x4000, scoped, tag = 'input window, operand 1, single buffered']
    #allocation7 [shape = 's32[1]{0}', space=sflag, size = 0x4, scoped, tag = 'scoped memory for tpu_custom_call.1']
    #allocation8 [shape = 'u8[16384]{0}', space=vmem, size = 0x4000, scoped, tag = 'input window, operand 2, single buffered']
    #allocation9 [shape = 'u8[512]{0}', space=vmem, size = 0x400, scoped, tag = 'output window, operand 0, single buffered']
    %8 = vsyncpa [#allocation5], 0
    %9 = vsyncpa [#allocation7], 0
    %10 = vsyncpa [#allocation3], 0
    %11 = vsyncpa [#allocation4], 0
    // Predicated region
    $region2: #{tpu_custom_call.1} parent=1 // pred_check
      _
    $region3: #{tpu_custom_call.1} parent=1 // pred_check_branch
      %13 = sbr.rel (0) target = $region5
    $region4: #{tpu_custom_call.1} parent=1 // pred_region
      %s15 = ssub.s32 16, 16
      %16 = vsyncadd [#allocation5], %s15
      %19 = dma.hbm_to_smem %s0, 16, [#allocation2], [#allocation5]
    $region5: #{tpu_custom_call.1} parent=1 // pred_fallthru
      _
    // Predicated region
    $region6: #{tpu_custom_call.1} parent=1 // pred_check
      _
    $region7: #{tpu_custom_call.1} parent=1 // pred_check_branch
      %21 = sbr.rel (0) target = $region9
    $region8: #{tpu_custom_call.1} parent=1 // pred_region
      %s23 = ssub.s32 512, 512
      %24 = vsyncadd [#allocation7], %s23
      %27 = dma.hbm_to_smem %s1, 512, [#allocation6], [#allocation7]
    $region9: #{tpu_custom_call.1} parent=1 // pred_fallthru
      _
    // Predicated region
    $region10: #{tpu_custom_call.1} parent=1 // pred_check
      _
    $region11: #{tpu_custom_call.1} parent=1 // pred_check_branch
      %29 = sbr.rel (0) target = $region13
    $region12: #{tpu_custom_call.1} parent=1 // pred_region
      %s31 = ssub.s32 512, 512
      %32 = vsyncadd [#allocation3], %s31
      %s33 = sshll.u32 [#allocation8], 4
      %s34 = int_to_ptr.vmem [resolvable:$true] %s33
      %39 = dma.hbm_to_vmem [thread:$0]  %s2, 512, %s34, [#allocation3], 128, 128, 8
    $region13: #{tpu_custom_call.1} parent=1 // pred_fallthru
      _
    // Predicated region
    $region14: #{tpu_custom_call.1} parent=1 // pred_check
      _
    $region15: #{tpu_custom_call.1} parent=1 // pred_check_branch
      %41 = sbr.rel (0) target = $region17
    $region16: #{tpu_custom_call.1} parent=1 // pred_region
      %42 = dma.done [#allocation5], 16
    $region17: #{tpu_custom_call.1} parent=1 // pred_fallthru
      _
    // Predicated region
    $region18: #{tpu_custom_call.1} parent=1 // pred_check
      _
    $region19: #{tpu_custom_call.1} parent=1 // pred_check_branch
      %44 = sbr.rel (0) target = $region21
    $region20: #{tpu_custom_call.1} parent=1 // pred_region
      %45 = dma.done [#allocation7], 512
    $region21: #{tpu_custom_call.1} parent=1 // pred_fallthru
      _
    // Predicated region
    $region22: #{tpu_custom_call.1} parent=1 // pred_check
      _
    $region23: #{tpu_custom_call.1} parent=1 // pred_check_branch
      %47 = sbr.rel (0) target = $region25
    $region24: #{tpu_custom_call.1} parent=1 // pred_region
      %48 = dma.done [#allocation3], 512
    $region25: #{tpu_custom_call.1} parent=1 // pred_fallthru
      _
    %49 = sfence
    %v50 = vld [vmem:[#allocation8] sm:$0xff]
    %v51 = vld [vmem:[#allocation8 + $0x8] sm:$0xff]
    %v52 = vld [vmem:[#allocation8 + $0x10] sm:$0xff]
    %v53 = vld [vmem:[#allocation8 + $0x18] sm:$0xff]
    %v54 = vmax.f32 %v50, %v51
    %v55 = vmax.f32 %v52, %v53
    %v56 = vmax.f32 %v54, %v55
    %57 = vmax.xlane.f32.xlu0 %v56
    %v58 = vpop.xlane.xlu0 %57
    %v59 = vrot.slane %v58, 4
    %v60 = vmax.f32 %v58, %v59
    %v61 = vrot.slane %v60, 2
    %v62 = vmax.f32 %v60, %v61
    %v63 = vrot.slane %v62, 1
    %v64 = vmax.f32 %v62, %v63
    %s65 = vtos %v64
    %v66 = vstv %s65
    %v67 = vsub.f32 %v50, %v66
    %v68 = vsub.f32 %v51, %v66
    %v69 = vsub.f32 %v52, %v66
    %v70 = vsub.f32 %v53, %v66
    %v71 = vmul.f32 %v67, 1.442695
    %v72 = vpow.pop %v71
    %v73 = vmul.f32 %v68, 1.442695
    %v74 = vpow.pop %v73
    %v75 = vmul.f32 %v69, 1.442695
    %v76 = vpow.pop %v75
    %v77 = vmul.f32 %v70, 1.442695
    %v78 = vpow.pop %v77
    %v79 = vadd.f32 %v72, %v74
    %v80 = vadd.f32 %v79, %v76
    %v81 = vadd.f32 %v80, %v78
    %82 = vadd.xlane.f32.xlu0 %v81
    %v83 = vpop.xlane.xlu0 %82
    %v84 = vrot.slane %v83, 4
    %v85 = vadd.f32 %v83, %v84
    %v86 = vrot.slane %v85, 2
    %v87 = vadd.f32 %v85, %v86
    %v88 = vrot.slane %v87, 1
    %v89 = vadd.f32 %v87, %v88
    %s90 = vtos %v89
    %v91 = vstv %s90
    %v92 = vlog2.pop %v91
    %v93 = vmul.f32 %v92, 0.6931472
    %v94 = vadd.f32 %v66, %v93
    %v95 = vlaneseq
    %v96 = vand.u32 %v95, 127
    %s97 = sld [smem:[#allocation2]]
    %s98 = sld [smem:[#allocation2 + $0x1]]
    %s99 = sld [smem:[#allocation2 + $0x2]]
    %s100 = smul.u32 %s97, 16
    %s101 = sadd.s32 %s100, %s98
    %s102 = smul.u32 %s101, 16
    %s103 = sadd.s32 %s102, %s99
    %p104 = scmp.gt.s32.totalorder %s103, 0
    %s105 = scalar_select %p104, %s103, 0
    %p106 = scmp.lt.s32.totalorder %s105, 4095
    %s107 = scalar_select %p106, %s105, 4095
    %s108 = sld [smem:[#allocation6 + %s107]]
    %vm109 = vcmp.eq.s32.totalorder %v96, 0
    %v110 = vstv %s108
    %v111 = vsel %vm109, %v110, 0.0
    %s112 = sld [smem:[#allocation2 + $0x3]]
    %s113 = sld [smem:[#allocation2 + $0x4]]
    %s114 = sld [smem:[#allocation2 + $0x5]]
    %s115 = smul.u32 %s112, 16
    %s116 = sadd.s32 %s115, %s113
    %s117 = smul.u32 %s116, 16
    %s118 = sadd.s32 %s117, %s114
    %p119 = scmp.gt.s32.totalorder %s118, 0
    %s120 = scalar_select %p119, %s118, 0
    %p121 = scmp.lt.s32.totalorder %s120, 4095
    %s122 = scalar_select %p121, %s120, 4095
    %s123 = sld [smem:[#allocation6 + %s122]]
    %vm124 = vcmp.eq.s32.totalorder %v96, 1
    %v125 = vstv %s123
    %v126 = vsel %vm124, %v125, %v111
    %s127 = sld [smem:[#allocation2 + $0x6]]
    %s128 = sld [smem:[#allocation2 + $0x7]]
    %s129 = sld [smem:[#allocation2 + $0x8]]
    %s130 = smul.u32 %s127, 16
    %s131 = sadd.s32 %s130, %s128
    %s132 = smul.u32 %s131, 16
    %s133 = sadd.s32 %s132, %s129
    %p134 = scmp.gt.s32.totalorder %s133, 0
    %s135 = scalar_select %p134, %s133, 0
    %p136 = scmp.lt.s32.totalorder %s135, 4095
    %s137 = scalar_select %p136, %s135, 4095
    %s138 = sld [smem:[#allocation6 + %s137]]
    %vm139 = vcmp.eq.s32.totalorder %v96, 2
    %v140 = vstv %s138
    %v141 = vsel %vm139, %v140, %v126
    %s142 = sld [smem:[#allocation2 + $0x9]]
    %s143 = sld [smem:[#allocation2 + $0xa]]
    %s144 = sld [smem:[#allocation2 + $0xb]]
    %s145 = smul.u32 %s142, 16
    %s146 = sadd.s32 %s145, %s143
    %s147 = smul.u32 %s146, 16
    %s148 = sadd.s32 %s147, %s144
    %p149 = scmp.gt.s32.totalorder %s148, 0
    %s150 = scalar_select %p149, %s148, 0
    %p151 = scmp.lt.s32.totalorder %s150, 4095
    %s152 = scalar_select %p151, %s150, 4095
    %s153 = sld [smem:[#allocation6 + %s152]]
    %vm154 = vcmp.eq.s32.totalorder %v96, 3
    %v155 = vstv %s153
    %v156 = vsel %vm154, %v155, %v141
    %s157 = sld [smem:[#allocation2 + $0xc]]
    %s158 = sld [smem:[#allocation2 + $0xd]]
    %s159 = sld [smem:[#allocation2 + $0xe]]
    %s160 = smul.u32 %s157, 16
    %s161 = sadd.s32 %s160, %s158
    %s162 = smul.u32 %s161, 16
    %s163 = sadd.s32 %s162, %s159
    %p164 = scmp.gt.s32.totalorder %s163, 0
    %s165 = scalar_select %p164, %s163, 0
    %p166 = scmp.lt.s32.totalorder %s165, 4095
    %s167 = scalar_select %p166, %s165, 4095
    %s168 = sld [smem:[#allocation6 + %s167]]
    %vm169 = vcmp.eq.s32.totalorder %v96, 4
    %v170 = vstv %s168
    %v171 = vsel %vm169, %v170, %v156
    %s172 = sld [smem:[#allocation2 + $0xf]]
    %s173 = sld [smem:[#allocation2 + $0x10]]
    %s174 = sld [smem:[#allocation2 + $0x11]]
    %s175 = smul.u32 %s172, 16
    %s176 = sadd.s32 %s175, %s173
    %s177 = smul.u32 %s176, 16
    %s178 = sadd.s32 %s177, %s174
    %p179 = scmp.gt.s32.totalorder %s178, 0
    %s180 = scalar_select %p179, %s178, 0
    %p181 = scmp.lt.s32.totalorder %s180, 4095
    %s182 = scalar_select %p181, %s180, 4095
    %s183 = sld [smem:[#allocation6 + %s182]]
    %vm184 = vcmp.eq.s32.totalorder %v96, 5
    %v185 = vstv %s183
    %v186 = vsel %vm184, %v185, %v171
    %s187 = sld [smem:[#allocation2 + $0x12]]
    %s188 = sld [smem:[#allocation2 + $0x13]]
    %s189 = sld [smem:[#allocation2 + $0x14]]
    %s190 = smul.u32 %s187, 16
    %s191 = sadd.s32 %s190, %s188
    %s192 = smul.u32 %s191, 16
    %s193 = sadd.s32 %s192, %s189
    %p194 = scmp.gt.s32.totalorder %s193, 0
    %s195 = scalar_select %p194, %s193, 0
    %p196 = scmp.lt.s32.totalorder %s195, 4095
    %s197 = scalar_select %p196, %s195, 4095
    %s198 = sld [smem:[#allocation6 + %s197]]
    %vm199 = vcmp.eq.s32.totalorder %v96, 6
    %v200 = vstv %s198
    %v201 = vsel %vm199, %v200, %v186
    %s202 = sld [smem:[#allocation2 + $0x15]]
    %s203 = sld [smem:[#allocation2 + $0x16]]
    %s204 = sld [smem:[#allocation2 + $0x17]]
    %s205 = smul.u32 %s202, 16
    %s206 = sadd.s32 %s205, %s203
    %s207 = smul.u32 %s206, 16
    %s208 = sadd.s32 %s207, %s204
    %p209 = scmp.gt.s32.totalorder %s208, 0
    %s210 = scalar_select %p209, %s208, 0
    %p211 = scmp.lt.s32.totalorder %s210, 4095
    %s212 = scalar_select %p211, %s210, 4095
    %s213 = sld [smem:[#allocation6 + %s212]]
    %vm214 = vcmp.eq.s32.totalorder %v96, 7
    %v215 = vstv %s213
    %v216 = vsel %vm214, %v215, %v201
    %v217 = vsub.f32 %v216, %v94
    %218 = vst [vmem:[#allocation9] sm:$0x1] %v217
    // Predicated region
    $region26: #{tpu_custom_call.1} parent=1 // pred_check
      _
    $region27: #{tpu_custom_call.1} parent=1 // pred_check_branch
      %220 = sbr.rel (0) target = $region29
    $region28: #{tpu_custom_call.1} parent=1 // pred_region
      %s222 = ssub.s32 16, 16
      %223 = vsyncadd [#allocation4], %s222
      %s225 = sshll.u32 [#allocation9], 4
      %s226 = int_to_ptr.vmem [resolvable:$true] %s225
      %228 = dma.vmem_to_hbm [thread:$0]  %s226, 16, %s3, [#allocation4]
    $region29: #{tpu_custom_call.1} parent=1 // pred_fallthru
      _
    // Predicated region
    $region30: #{tpu_custom_call.1} parent=1 // pred_check
      _
    $region31: #{tpu_custom_call.1} parent=1 // pred_check_branch
      %230 = sbr.rel (0) target = $region33
    $region32: #{tpu_custom_call.1} parent=1 // pred_region
      %231 = dma.done [#allocation4], 16
    $region33: #{tpu_custom_call.1} parent=1 // pred_fallthru
      _
    %232 = vsyncpa [#allocation3], 1
    %233 = vsyncpa [#allocation4], 1
    %234 = vsyncpa [#allocation5], 1
    %235 = vsyncpa [#allocation7], 1

</llo_original>
